<compile_context>
chip_gen: v7x
topology: tpu7x:2x2x1
jax: 0.10.0
libtpu: 0.0.40
codegen_flags: <defaults>
</compile_context>

<pallas_src>
import functools

import jax
import jax.numpy as jnp
from jax import lax
from jax.experimental import pallas as pl
from jax.experimental.pallas import tpu as pltpu


def _spatial_attention_kernel(x_ref, w_ref, b_ref, o_ref, max_acc, sum_acc,
                              *, kernel_size, num_channels, height, width):
    # x_ref   : (bt, ct, H*W)  VMEM  (lane-dense channel block)
    # w_ref   : (2*k*k,)       SMEM  (conv weight, [max-channel | avg-channel])
    # b_ref   : (1,)           SMEM  (conv bias)
    # o_ref   : (bt, 1, H*W)   VMEM  (attention map, written at last channel step)
    # max_acc : (bt, H*W) f32  VMEM scratch (running channel max)
    # sum_acc : (bt, H*W) f32  VMEM scratch (running channel sum)
    k = kernel_size
    p = (k - 1) // 2
    H, W = height, width
    HW = H * W

    c_idx = pl.program_id(1)
    nc = pl.num_programs(1)

    # ---- channel reduction: one load of the block, both max and sum from it ----
    x = x_ref[...].astype(jnp.float32)            # (bt, ct, HW), f32 math
    blk_max = jnp.max(x, axis=1)                  # (bt, HW)
    blk_sum = jnp.sum(x, axis=1)                  # (bt, HW)

    @pl.when(c_idx == 0)
    def _():
        max_acc[...] = jnp.full_like(max_acc, -jnp.inf)
        sum_acc[...] = jnp.zeros_like(sum_acc)

    max_acc[...] = jnp.maximum(max_acc[...], blk_max)
    sum_acc[...] = sum_acc[...] + blk_sum

    # ---- finalize: tiny 2->1 'same' conv + sigmoid, lane-dense store ----
    @pl.when(c_idx == nc - 1)
    def _():
        bt = max_acc.shape[0]
        pad_amt = p * W + p                        # flat-index padding for all shifts

        mx = max_acc[...]                                        # (bt, HW)
        av = sum_acc[...] * (1.0 / num_channels)                 # mean over channels
        mx_pad = jnp.pad(mx, ((0, 0), (pad_amt, pad_amt)))       # pad once, reuse
        av_pad = jnp.pad(av, ((0, 0), (pad_amt, pad_amt)))

        # Column index of each flattened spatial position (masks row-wrap terms).
        col = lax.broadcasted_iota(jnp.int32, (1, HW), 1) % W

        # Hoisted 1-D SMEM weight reads; channel 0 = max, channel 1 = avg
        # (matches torch.cat([max_pool, avg_pool], dim=1)).
        w_max = [w_ref[ki * k + kj] for ki in range(k) for kj in range(k)]
        w_avg = [w_ref[k * k + ki * k + kj] for ki in range(k) for kj in range(k)]

        acc = jnp.full((bt, HW), b_ref[0], dtype=jnp.float32)
        for ki in range(k):
            di = ki - p
            for kj in range(k):
                dj = kj - p
                off = pad_amt + di * W + dj        # static flat shift
                vmx = mx_pad[:, off:off + HW]
                vav = av_pad[:, off:off + HW]
                term = w_max[ki * k + kj] * vmx + w_avg[ki * k + kj] * vav
                if dj != 0:
                    # Kill row-wrap contributions (vertical OOB is already zero
                    # thanks to the flat zero padding).
                    cmask = jnp.logical_and(col + dj >= 0, col + dj < W)
                    term = jnp.where(cmask, term, 0.0)
                acc = acc + term

        att = jax.nn.sigmoid(acc)                                # (bt, HW)
        o_ref[:, 0, :] = att.astype(o_ref.dtype)


def spatial_attention(x, weight, bias, kernel_size):
    """x: (B, C, H, W); weight: (1, 2, k, k); bias: (1,). Returns (B, C, H, W)."""
    B, C, H, W = x.shape
    k = kernel_size
    assert k % 2 == 1, "Odd kernel size required"
    HW = H * W

    x_flat = x.reshape(B, C, HW)                                 # lane-dense layout
    w_flat = weight.reshape(2 * k * k).astype(jnp.float32)       # 1-D SMEM weights
    b = bias.reshape(1).astype(jnp.float32)

    # ---- block sizing: target ~2 MiB input blocks ----
    elem = x_flat.dtype.itemsize
    target = 2 * 1024 * 1024
    per_batch = C * HW * elem

    if per_batch <= target:
        ct = C
        nc = 1
    else:
        ct = C  # fallback: whole channel axis (handled by vmem_limit bump below)
        for d in range(C, 0, -1):
            if C % d == 0 and d % 8 == 0 and d * HW * elem <= target:
                ct = d
                break
        nc = C // ct

    bt = 1
    if nc == 1:
        bt = max(1, target // max(1, per_batch))
        bt = min(bt, B)
        if B >= 2:                 # keep >= 2 parallel grid blocks for dual-TC (v7x)
            bt = max(1, min(bt, B // 2))
        while B % bt != 0:         # keep blocks exact (no partial batch blocks)
            bt -= 1
    nb = B // bt
    # Note: for B == 1 both TCs only get work if C is tiled; spatial H-tiling
    # (with conv halo) would be the next step for that corner case.

    # Raise the scoped VMEM limit only if the fallback produced oversized blocks.
    est_bytes = 2 * bt * ct * HW * elem + 4 * bt * HW * (elem + 4)
    cp_kwargs = dict(dimension_semantics=("parallel", "arbitrary"))
    if est_bytes > 12 * 1024 * 1024:
        cp_kwargs["vmem_limit_bytes"] = min(2 * est_bytes, 60 * 1024 * 1024)

    kernel = functools.partial(
        _spatial_attention_kernel,
        kernel_size=k, num_channels=C, height=H, width=W,
    )

    att = pl.pallas_call(
        kernel,
        out_shape=jax.ShapeDtypeStruct((B, 1, HW), x.dtype),
        grid=(nb, nc),
        in_specs=[
            pl.BlockSpec((bt, ct, HW), lambda bi, ci: (bi, ci, 0)),
            pl.BlockSpec(memory_space=pltpu.SMEM),   # conv weight (2*k*k,)
            pl.BlockSpec(memory_space=pltpu.SMEM),   # conv bias (1,)
        ],
        out_specs=pl.BlockSpec((bt, 1, HW), lambda bi, ci: (bi, 0, 0)),
        scratch_shapes=[
            pltpu.VMEM((bt, HW), jnp.float32),       # running channel max
            pltpu.VMEM((bt, HW), jnp.float32),       # running channel sum
        ],
        compiler_params=pltpu.CompilerParams(**cp_kwargs),
    )(x_flat, w_flat, b)

    att = att.reshape(B, 1, H, W)
    # Module interface returns the map repeated over channels; keep that shape
    # but leave the repeat as a (fusible) broadcast instead of C redundant HBM
    # writes from the kernel.
    return jnp.broadcast_to(att, (B, C, H, W))


def spatial_attention_ref(x, weight, bias, kernel_size):
    """Pure-JAX reference matching the PyTorch forward."""
    max_pool = jnp.max(x, axis=1, keepdims=True)
    avg_pool = jnp.mean(x, axis=1, keepdims=True)
    pool = jnp.concatenate([max_pool, avg_pool], axis=1)        # (B, 2, H, W)
    p = (kernel_size - 1) // 2
    conv = jax.lax.conv_general_dilated(
        pool, weight, window_strides=(1, 1), padding=[(p, p), (p, p)],
        dimension_numbers=("NCHW", "OIHW", "NCHW"),
    ) + bias.reshape(1, 1, 1, 1)
    att = jax.nn.sigmoid(conv)                                  # (B, 1, H, W)
    return jnp.broadcast_to(att, x.shape)                       # repeat over channels


if __name__ == "__main__":
    kernel_size = 3
    B, C, H, W = 2, 4, 16, 16

    key = jax.random.PRNGKey(0)
    kx, kw, kb = jax.random.split(key, 3)

    x = jax.random.normal(kx, (B, C, H, W), dtype=jnp.float32)

    # Deterministic synthetic conv parameters (shapes match nn.Conv2d(2, 1, k)).
    fan_in = 2 * kernel_size * kernel_size
    bound = 1.0 / (fan_in ** 0.5)
    weight = jax.random.uniform(kw, (1, 2, kernel_size, kernel_size),
                                minval=-bound, maxval=bound, dtype=jnp.float32)
    bias = jax.random.uniform(kb, (1,), minval=-bound, maxval=bound, dtype=jnp.float32)

    out = spatial_attention(x, weight, bias, kernel_size)
    out = jax.block_until_ready(out)

    ref = spatial_attention_ref(x, weight, bias, kernel_size)
    assert out.shape == (B, C, H, W)
    assert jnp.allclose(out, ref, atol=1e-5, rtol=1e-5), "mismatch vs reference"

    print("KERNEL_OK")
</pallas_src>

<mosaic_0001>
module attributes {stable_mosaic.version = 11 : i64} {
  func.func @_spatial_attention_kernel(%arg0: i32, %arg1: i32, %arg2: memref<1x4x256xf32, #tpu.memory_space<vmem>>, %arg3: memref<18xf32, #tpu.memory_space<smem>>, %arg4: memref<1xf32, #tpu.memory_space<smem>>, %arg5: memref<1x1x256xf32, #tpu.memory_space<vmem>>, %arg6: memref<1x256xf32, #tpu.memory_space<vmem>>, %arg7: memref<1x256xf32, #tpu.memory_space<vmem>>) attributes {dimension_semantics = [#tpu.dimension_semantics<parallel>, #tpu.dimension_semantics<arbitrary>], iteration_bounds = array<i64: 2, 1>, scalar_prefetch = 0 : i64, scratch_operands = 2 : i64, tpu.core_type = #tpu.core_type<tc>, window_params = [{transform_indices = @transform_0, window_bounds = array<i64: 1, 4, 256>}, {transform_indices = @transform_1, window_bounds = array<i64: 18>}, {transform_indices = @transform_2, window_bounds = array<i64: 1>}, {transform_indices = @transform_3, window_bounds = array<i64: 1, 1, 256>}]} {
    %c0 = arith.constant 0 : index
    %c0_0 = arith.constant 0 : index
    %c0_1 = arith.constant 0 : index
    %0 = vector.load %arg2[%c0, %c0_0, %c0_1] : memref<1x4x256xf32, #tpu.memory_space<vmem>>, vector<1x4x256xf32>
    %cst = arith.constant dense<0xFF800000> : vector<1x256xf32>
    %1 = vector.multi_reduction <maximumf>, %0, %cst [1] : vector<1x4x256xf32> to vector<1x256xf32>
    %cst_2 = arith.constant dense<0.000000e+00> : vector<1x256xf32>
    %2 = vector.multi_reduction <add>, %0, %cst_2 [1] : vector<1x4x256xf32> to vector<1x256xf32>
    %c0_i32 = arith.constant 0 : i32
    %3 = arith.cmpi eq, %arg1, %c0_i32 : i32
    %4 = arith.extui %3 : i1 to i32
    %c0_i32_3 = arith.constant 0 : i32
    %5 = arith.cmpi ne, %4, %c0_i32_3 : i32
    scf.if %5 {
      %cst_14 = arith.constant 0xFF800000 : f32
      %15 = vector.broadcast %cst_14 : f32 to vector<1x256xf32>
      %c0_15 = arith.constant 0 : index
      %c0_16 = arith.constant 0 : index
      %16 = vector.load %arg6[%c0_15, %c0_16] : memref<1x256xf32, #tpu.memory_space<vmem>>, vector<1x256xf32>
      tpu.vector_store %arg6[%c0_15, %c0_16], %15 {strides = array<i32>} : memref<1x256xf32, #tpu.memory_space<vmem>>, vector<1x256xf32>,
      %cst_17 = arith.constant 0.000000e+00 : f32
      %17 = vector.broadcast %cst_17 : f32 to vector<1x256xf32>
      %c0_18 = arith.constant 0 : index
      %c0_19 = arith.constant 0 : index
      %18 = vector.load %arg7[%c0_18, %c0_19] : memref<1x256xf32, #tpu.memory_space<vmem>>, vector<1x256xf32>
      tpu.vector_store %arg7[%c0_18, %c0_19], %17 {strides = array<i32>} : memref<1x256xf32, #tpu.memory_space<vmem>>, vector<1x256xf32>,
    } else {
    }
    %c0_4 = arith.constant 0 : index
    %c0_5 = arith.constant 0 : index
    %6 = vector.load %arg6[%c0_4, %c0_5] : memref<1x256xf32, #tpu.memory_space<vmem>>, vector<1x256xf32>
    %7 = arith.maximumf %6, %1 : vector<1x256xf32>
    %c0_6 = arith.constant 0 : index
    %c0_7 = arith.constant 0 : index
    %8 = vector.load %arg6[%c0_6, %c0_7] : memref<1x256xf32, #tpu.memory_space<vmem>>, vector<1x256xf32>
    tpu.vector_store %arg6[%c0_6, %c0_7], %7 {strides = array<i32>} : memref<1x256xf32, #tpu.memory_space<vmem>>, vector<1x256xf32>,
    %c0_8 = arith.constant 0 : index
    %c0_9 = arith.constant 0 : index
    %9 = vector.load %arg7[%c0_8, %c0_9] : memref<1x256xf32, #tpu.memory_space<vmem>>, vector<1x256xf32>
    %10 = arith.addf %9, %2 : vector<1x256xf32>
    %c0_10 = arith.constant 0 : index
    %c0_11 = arith.constant 0 : index
    %11 = vector.load %arg7[%c0_10, %c0_11] : memref<1x256xf32, #tpu.memory_space<vmem>>, vector<1x256xf32>
    tpu.vector_store %arg7[%c0_10, %c0_11], %10 {strides = array<i32>} : memref<1x256xf32, #tpu.memory_space<vmem>>, vector<1x256xf32>,
    %c0_i32_12 = arith.constant 0 : i32
    %12 = arith.cmpi eq, %arg1, %c0_i32_12 : i32
    %13 = arith.extui %12 : i1 to i32
    %c0_i32_13 = arith.constant 0 : i32
    %14 = arith.cmpi ne, %13, %c0_i32_13 : i32
    scf.if %14 {
      %c0_14 = arith.constant 0 : index
      %c0_15 = arith.constant 0 : index
      %15 = vector.load %arg6[%c0_14, %c0_15] : memref<1x256xf32, #tpu.memory_space<vmem>>, vector<1x256xf32>
      %c0_16 = arith.constant 0 : index
      %c0_17 = arith.constant 0 : index
      %16 = vector.load %arg7[%c0_16, %c0_17] : memref<1x256xf32, #tpu.memory_space<vmem>>, vector<1x256xf32>
      %cst_18 = arith.constant 2.500000e-01 : f32
      %17 = vector.broadcast %cst_18 : f32 to vector<1x256xf32>
      %18 = arith.mulf %16, %17 : vector<1x256xf32>
      %c0_i32_19 = arith.constant 0 : i32
      %19 = arith.sitofp %c0_i32_19 : i32 to f32
      %20 = vector.broadcast %19 : f32 to vector<1x17xf32>
      %21 = tpu.concatenate %20, %15 in 1 : vector<1x17xf32>, vector<1x256xf32> -> vector<1x273xf32>
      %22 = vector.broadcast %19 : f32 to vector<1x17xf32>
      %23 = tpu.concatenate %21, %22 in 1 : vector<1x273xf32>, vector<1x17xf32> -> vector<1x290xf32>
      %c0_i32_20 = arith.constant 0 : i32
      %24 = arith.sitofp %c0_i32_20 : i32 to f32
      %25 = vector.broadcast %24 : f32 to vector<1x17xf32>
      %26 = tpu.concatenate %25, %18 in 1 : vector<1x17xf32>, vector<1x256xf32> -> vector<1x273xf32>
      %27 = vector.broadcast %24 : f32 to vector<1x17xf32>
      %28 = tpu.concatenate %26, %27 in 1 : vector<1x273xf32>, vector<1x17xf32> -> vector<1x290xf32>
      %29 = tpu.iota {dimensions = array<i32: 1>} : vector<1x256xi32>
      %c16_i32 = arith.constant 16 : i32
      %c0_i32_21 = arith.constant 0 : i32
      %30 = arith.cmpi eq, %c16_i32, %c0_i32_21 : i32
      %c1_i32 = arith.constant 1 : i32
      %31 = arith.select %30, %c1_i32, %c16_i32 : i32
      %32 = vector.broadcast %31 : i32 to vector<1x256xi32>
      %33 = arith.remsi %29, %32 : vector<1x256xi32>
      %c0_i32_22 = arith.constant 0 : i32
      %34 = vector.broadcast %c0_i32_22 : i32 to vector<1x256xi32>
      %35 = arith.cmpi ne, %33, %34 : vector<1x256xi32>
      %c0_i32_23 = arith.constant 0 : i32
      %36 = vector.broadcast %c0_i32_23 : i32 to vector<1x256xi32>
      %37 = arith.cmpi slt, %33, %36 : vector<1x256xi32>
      %c0_i32_24 = arith.constant 0 : i32
      %38 = arith.cmpi slt, %31, %c0_i32_24 : i32
      %39 = vector.broadcast %38 : i1 to vector<1x256xi1>
      %40 = vector.broadcast %39 : vector<1x256xi1> to vector<1x256xi1>
      %41 = arith.xori %37, %40 : vector<1x256xi1>
      %42 = arith.andi %41, %35 : vector<1x256xi1>
      %43 = vector.broadcast %31 : i32 to vector<1x256xi32>
      %44 = arith.addi %33, %43 : vector<1x256xi32>
      %45 = arith.select %42, %44, %33 : vector<1x256xi1>, vector<1x256xi32>
      %c0_25 = arith.constant 0 : index
      %46 = memref.load %arg3[%c0_25] : memref<18xf32, #tpu.memory_space<smem>>
      %c1 = arith.constant 1 : index
      %47 = memref.load %arg3[%c1] : memref<18xf32, #tpu.memory_space<smem>>
      %c2 = arith.constant 2 : index
      %48 = memref.load %arg3[%c2] : memref<18xf32, #tpu.memory_space<smem>>
      %c3 = arith.constant 3 : index
      %49 = memref.load %arg3[%c3] : memref<18xf32, #tpu.memory_space<smem>>
      %c4 = arith.constant 4 : index
      %50 = memref.load %arg3[%c4] : memref<18xf32, #tpu.memory_space<smem>>
      %c5 = arith.constant 5 : index
      %51 = memref.load %arg3[%c5] : memref<18xf32, #tpu.memory_space<smem>>
      %c6 = arith.constant 6 : index
      %52 = memref.load %arg3[%c6] : memref<18xf32, #tpu.memory_space<smem>>
      %c7 = arith.constant 7 : index
      %53 = memref.load %arg3[%c7] : memref<18xf32, #tpu.memory_space<smem>>
      %c8 = arith.constant 8 : index
      %54 = memref.load %arg3[%c8] : memref<18xf32, #tpu.memory_space<smem>>
      %c9 = arith.constant 9 : index
      %55 = memref.load %arg3[%c9] : memref<18xf32, #tpu.memory_space<smem>>
      %c10 = arith.constant 10 : index
      %56 = memref.load %arg3[%c10] : memref<18xf32, #tpu.memory_space<smem>>
      %c11 = arith.constant 11 : index
      %57 = memref.load %arg3[%c11] : memref<18xf32, #tpu.memory_space<smem>>
      %c12 = arith.constant 12 : index
      %58 = memref.load %arg3[%c12] : memref<18xf32, #tpu.memory_space<smem>>
      %c13 = arith.constant 13 : index
      %59 = memref.load %arg3[%c13] : memref<18xf32, #tpu.memory_space<smem>>
      %c14 = arith.constant 14 : index
      %60 = memref.load %arg3[%c14] : memref<18xf32, #tpu.memory_space<smem>>
      %c15 = arith.constant 15 : index
      %61 = memref.load %arg3[%c15] : memref<18xf32, #tpu.memory_space<smem>>
      %c16 = arith.constant 16 : index
      %62 = memref.load %arg3[%c16] : memref<18xf32, #tpu.memory_space<smem>>
      %c17 = arith.constant 17 : index
      %63 = memref.load %arg3[%c17] : memref<18xf32, #tpu.memory_space<smem>>
      %c0_26 = arith.constant 0 : index
      %64 = memref.load %arg4[%c0_26] : memref<1xf32, #tpu.memory_space<smem>>
      %65 = vector.broadcast %64 : f32 to vector<1x256xf32>
      %66 = vector.extract_strided_slice %23 {offsets = [0, 0], sizes = [1, 256], strides = [1, 1]} : vector<1x290xf32> to vector<1x256xf32>
      %67 = vector.extract_strided_slice %28 {offsets = [0, 0], sizes = [1, 256], strides = [1, 1]} : vector<1x290xf32> to vector<1x256xf32>
      %68 = vector.broadcast %46 : f32 to vector<1x256xf32>
      %69 = arith.mulf %68, %66 : vector<1x256xf32>
      %70 = vector.broadcast %55 : f32 to vector<1x256xf32>
      %71 = arith.mulf %70, %67 : vector<1x256xf32>
      %72 = arith.addf %69, %71 : vector<1x256xf32>
      %c-1_i32 = arith.constant -1 : i32
      %73 = vector.broadcast %c-1_i32 : i32 to vector<1x256xi32>
      %74 = arith.addi %45, %73 : vector<1x256xi32>
      %c0_i32_27 = arith.constant 0 : i32
      %75 = vector.broadcast %c0_i32_27 : i32 to vector<1x256xi32>
      %76 = arith.cmpi sge, %74, %75 : vector<1x256xi32>
      %c-1_i32_28 = arith.constant -1 : i32
      %77 = vector.broadcast %c-1_i32_28 : i32 to vector<1x256xi32>
      %78 = arith.addi %45, %77 : vector<1x256xi32>
      %c16_i32_29 = arith.constant 16 : i32
      %79 = vector.broadcast %c16_i32_29 : i32 to vector<1x256xi32>
      %80 = arith.cmpi slt, %78, %79 : vector<1x256xi32>
      %81 = arith.andi %76, %80 : vector<1x256xi1>
      %cst_30 = arith.constant 0.000000e+00 : f32
      %82 = vector.broadcast %cst_30 : f32 to vector<1x256xf32>
      %83 = arith.select %81, %72, %82 : vector<1x256xi1>, vector<1x256xf32>
      %84 = arith.addf %65, %83 : vector<1x256xf32>
      %85 = vector.extract_strided_slice %23 {offsets = [0, 1], sizes = [1, 256], strides = [1, 1]} : vector<1x290xf32> to vector<1x256xf32>
      %86 = vector.extract_strided_slice %28 {offsets = [0, 1], sizes = [1, 256], strides = [1, 1]} : vector<1x290xf32> to vector<1x256xf32>
      %87 = vector.broadcast %47 : f32 to vector<1x256xf32>
      %88 = arith.mulf %87, %85 : vector<1x256xf32>
      %89 = vector.broadcast %56 : f32 to vector<1x256xf32>
      %90 = arith.mulf %89, %86 : vector<1x256xf32>
      %91 = arith.addf %88, %90 : vector<1x256xf32>
      %92 = arith.addf %84, %91 : vector<1x256xf32>
      %93 = vector.extract_strided_slice %23 {offsets = [0, 2], sizes = [1, 256], strides = [1, 1]} : vector<1x290xf32> to vector<1x256xf32>
      %94 = vector.extract_strided_slice %28 {offsets = [0, 2], sizes = [1, 256], strides = [1, 1]} : vector<1x290xf32> to vector<1x256xf32>
      %95 = vector.broadcast %48 : f32 to vector<1x256xf32>
      %96 = arith.mulf %95, %93 : vector<1x256xf32>
      %97 = vector.broadcast %57 : f32 to vector<1x256xf32>
      %98 = arith.mulf %97, %94 : vector<1x256xf32>
      %99 = arith.addf %96, %98 : vector<1x256xf32>
      %c1_i32_31 = arith.constant 1 : i32
      %100 = vector.broadcast %c1_i32_31 : i32 to vector<1x256xi32>
      %101 = arith.addi %45, %100 : vector<1x256xi32>
      %c0_i32_32 = arith.constant 0 : i32
      %102 = vector.broadcast %c0_i32_32 : i32 to vector<1x256xi32>
      %103 = arith.cmpi sge, %101, %102 : vector<1x256xi32>
      %c1_i32_33 = arith.constant 1 : i32
      %104 = vector.broadcast %c1_i32_33 : i32 to vector<1x256xi32>
      %105 = arith.addi %45, %104 : vector<1x256xi32>
      %c16_i32_34 = arith.constant 16 : i32
      %106 = vector.broadcast %c16_i32_34 : i32 to vector<1x256xi32>
      %107 = arith.cmpi slt, %105, %106 : vector<1x256xi32>
      %108 = arith.andi %103, %107 : vector<1x256xi1>
      %cst_35 = arith.constant 0.000000e+00 : f32
      %109 = vector.broadcast %cst_35 : f32 to vector<1x256xf32>
      %110 = arith.select %108, %99, %109 : vector<1x256xi1>, vector<1x256xf32>
      %111 = arith.addf %92, %110 : vector<1x256xf32>
      %112 = vector.extract_strided_slice %23 {offsets = [0, 16], sizes = [1, 256], strides = [1, 1]} : vector<1x290xf32> to vector<1x256xf32>
      %113 = vector.extract_strided_slice %28 {offsets = [0, 16], sizes = [1, 256], strides = [1, 1]} : vector<1x290xf32> to vector<1x256xf32>
      %114 = vector.broadcast %49 : f32 to vector<1x256xf32>
      %115 = arith.mulf %114, %112 : vector<1x256xf32>
      %116 = vector.broadcast %58 : f32 to vector<1x256xf32>
      %117 = arith.mulf %116, %113 : vector<1x256xf32>
      %118 = arith.addf %115, %117 : vector<1x256xf32>
      %c-1_i32_36 = arith.constant -1 : i32
      %119 = vector.broadcast %c-1_i32_36 : i32 to vector<1x256xi32>
      %120 = arith.addi %45, %119 : vector<1x256xi32>
      %c0_i32_37 = arith.constant 0 : i32
      %121 = vector.broadcast %c0_i32_37 : i32 to vector<1x256xi32>
      %122 = arith.cmpi sge, %120, %121 : vector<1x256xi32>
      %c-1_i32_38 = arith.constant -1 : i32
      %123 = vector.broadcast %c-1_i32_38 : i32 to vector<1x256xi32>
      %124 = arith.addi %45, %123 : vector<1x256xi32>
      %c16_i32_39 = arith.constant 16 : i32
      %125 = vector.broadcast %c16_i32_39 : i32 to vector<1x256xi32>
      %126 = arith.cmpi slt, %124, %125 : vector<1x256xi32>
      %127 = arith.andi %122, %126 : vector<1x256xi1>
      %cst_40 = arith.constant 0.000000e+00 : f32
      %128 = vector.broadcast %cst_40 : f32 to vector<1x256xf32>
      %129 = arith.select %127, %118, %128 : vector<1x256xi1>, vector<1x256xf32>
      %130 = arith.addf %111, %129 : vector<1x256xf32>
      %131 = vector.extract_strided_slice %23 {offsets = [0, 17], sizes = [1, 256], strides = [1, 1]} : vector<1x290xf32> to vector<1x256xf32>
      %132 = vector.extract_strided_slice %28 {offsets = [0, 17], sizes = [1, 256], strides = [1, 1]} : vector<1x290xf32> to vector<1x256xf32>
      %133 = vector.broadcast %50 : f32 to vector<1x256xf32>
      %134 = arith.mulf %133, %131 : vector<1x256xf32>
      %135 = vector.broadcast %59 : f32 to vector<1x256xf32>
      %136 = arith.mulf %135, %132 : vector<1x256xf32>
      %137 = arith.addf %134, %136 : vector<1x256xf32>
      %138 = arith.addf %130, %137 : vector<1x256xf32>
      %139 = vector.extract_strided_slice %23 {offsets = [0, 18], sizes = [1, 256], strides = [1, 1]} : vector<1x290xf32> to vector<1x256xf32>
      %140 = vector.extract_strided_slice %28 {offsets = [0, 18], sizes = [1, 256], strides = [1, 1]} : vector<1x290xf32> to vector<1x256xf32>
      %141 = vector.broadcast %51 : f32 to vector<1x256xf32>
      %142 = arith.mulf %141, %139 : vector<1x256xf32>
      %143 = vector.broadcast %60 : f32 to vector<1x256xf32>
      %144 = arith.mulf %143, %140 : vector<1x256xf32>
      %145 = arith.addf %142, %144 : vector<1x256xf32>
      %c1_i32_41 = arith.constant 1 : i32
      %146 = vector.broadcast %c1_i32_41 : i32 to vector<1x256xi32>
      %147 = arith.addi %45, %146 : vector<1x256xi32>
      %c0_i32_42 = arith.constant 0 : i32
      %148 = vector.broadcast %c0_i32_42 : i32 to vector<1x256xi32>
      %149 = arith.cmpi sge, %147, %148 : vector<1x256xi32>
      %c1_i32_43 = arith.constant 1 : i32
      %150 = vector.broadcast %c1_i32_43 : i32 to vector<1x256xi32>
      %151 = arith.addi %45, %150 : vector<1x256xi32>
      %c16_i32_44 = arith.constant 16 : i32
      %152 = vector.broadcast %c16_i32_44 : i32 to vector<1x256xi32>
      %153 = arith.cmpi slt, %151, %152 : vector<1x256xi32>
      %154 = arith.andi %149, %153 : vector<1x256xi1>
      %cst_45 = arith.constant 0.000000e+00 : f32
      %155 = vector.broadcast %cst_45 : f32 to vector<1x256xf32>
      %156 = arith.select %154, %145, %155 : vector<1x256xi1>, vector<1x256xf32>
      %157 = arith.addf %138, %156 : vector<1x256xf32>
      %158 = vector.extract_strided_slice %23 {offsets = [0, 32], sizes = [1, 256], strides = [1, 1]} : vector<1x290xf32> to vector<1x256xf32>
      %159 = vector.extract_strided_slice %28 {offsets = [0, 32], sizes = [1, 256], strides = [1, 1]} : vector<1x290xf32> to vector<1x256xf32>
      %160 = vector.broadcast %52 : f32 to vector<1x256xf32>
      %161 = arith.mulf %160, %158 : vector<1x256xf32>
      %162 = vector.broadcast %61 : f32 to vector<1x256xf32>
      %163 = arith.mulf %162, %159 : vector<1x256xf32>
      %164 = arith.addf %161, %163 : vector<1x256xf32>
      %c-1_i32_46 = arith.constant -1 : i32
      %165 = vector.broadcast %c-1_i32_46 : i32 to vector<1x256xi32>
      %166 = arith.addi %45, %165 : vector<1x256xi32>
      %c0_i32_47 = arith.constant 0 : i32
      %167 = vector.broadcast %c0_i32_47 : i32 to vector<1x256xi32>
      %168 = arith.cmpi sge, %166, %167 : vector<1x256xi32>
      %c-1_i32_48 = arith.constant -1 : i32
      %169 = vector.broadcast %c-1_i32_48 : i32 to vector<1x256xi32>
      %170 = arith.addi %45, %169 : vector<1x256xi32>
      %c16_i32_49 = arith.constant 16 : i32
      %171 = vector.broadcast %c16_i32_49 : i32 to vector<1x256xi32>
      %172 = arith.cmpi slt, %170, %171 : vector<1x256xi32>
      %173 = arith.andi %168, %172 : vector<1x256xi1>
      %cst_50 = arith.constant 0.000000e+00 : f32
      %174 = vector.broadcast %cst_50 : f32 to vector<1x256xf32>
      %175 = arith.select %173, %164, %174 : vector<1x256xi1>, vector<1x256xf32>
      %176 = arith.addf %157, %175 : vector<1x256xf32>
      %177 = vector.extract_strided_slice %23 {offsets = [0, 33], sizes = [1, 256], strides = [1, 1]} : vector<1x290xf32> to vector<1x256xf32>
      %178 = vector.extract_strided_slice %28 {offsets = [0, 33], sizes = [1, 256], strides = [1, 1]} : vector<1x290xf32> to vector<1x256xf32>
      %179 = vector.broadcast %53 : f32 to vector<1x256xf32>
      %180 = arith.mulf %179, %177 : vector<1x256xf32>
      %181 = vector.broadcast %62 : f32 to vector<1x256xf32>
      %182 = arith.mulf %181, %178 : vector<1x256xf32>
      %183 = arith.addf %180, %182 : vector<1x256xf32>
      %184 = arith.addf %176, %183 : vector<1x256xf32>
      %185 = vector.extract_strided_slice %23 {offsets = [0, 34], sizes = [1, 256], strides = [1, 1]} : vector<1x290xf32> to vector<1x256xf32>
      %186 = vector.extract_strided_slice %28 {offsets = [0, 34], sizes = [1, 256], strides = [1, 1]} : vector<1x290xf32> to vector<1x256xf32>
      %187 = vector.broadcast %54 : f32 to vector<1x256xf32>
      %188 = arith.mulf %187, %185 : vector<1x256xf32>
      %189 = vector.broadcast %63 : f32 to vector<1x256xf32>
      %190 = arith.mulf %189, %186 : vector<1x256xf32>
      %191 = arith.addf %188, %190 : vector<1x256xf32>
      %c1_i32_51 = arith.constant 1 : i32
      %192 = vector.broadcast %c1_i32_51 : i32 to vector<1x256xi32>
      %193 = arith.addi %45, %192 : vector<1x256xi32>
      %c0_i32_52 = arith.constant 0 : i32
      %194 = vector.broadcast %c0_i32_52 : i32 to vector<1x256xi32>
      %195 = arith.cmpi sge, %193, %194 : vector<1x256xi32>
      %c1_i32_53 = arith.constant 1 : i32
      %196 = vector.broadcast %c1_i32_53 : i32 to vector<1x256xi32>
      %197 = arith.addi %45, %196 : vector<1x256xi32>
      %c16_i32_54 = arith.constant 16 : i32
      %198 = vector.broadcast %c16_i32_54 : i32 to vector<1x256xi32>
      %199 = arith.cmpi slt, %197, %198 : vector<1x256xi32>
      %200 = arith.andi %195, %199 : vector<1x256xi1>
      %cst_55 = arith.constant 0.000000e+00 : f32
      %201 = vector.broadcast %cst_55 : f32 to vector<1x256xf32>
      %202 = arith.select %200, %191, %201 : vector<1x256xi1>, vector<1x256xf32>
      %203 = arith.addf %184, %202 : vector<1x256xf32>
      %204 = arith.negf %203 : vector<1x256xf32>
      %205 = math.exp %204 : vector<1x256xf32>
      %cst_56 = arith.constant 1.000000e+00 : f32
      %206 = vector.broadcast %cst_56 : f32 to vector<1x256xf32>
      %207 = arith.addf %206, %205 : vector<1x256xf32>
      %208 = arith.divf %206, %207 : vector<1x256xf32>
      %c0_57 = arith.constant 0 : index
      %c0_58 = arith.constant 0 : index
      %c0_59 = arith.constant 0 : index
      %209 = vector.load %arg5[%c0_57, %c0_58, %c0_59] : memref<1x1x256xf32, #tpu.memory_space<vmem>>, vector<1x1x256xf32>
      %210 = vector.shape_cast %209 : vector<1x1x256xf32> to vector<1x256xf32>
      %211 = vector.shape_cast %208 : vector<1x256xf32> to vector<1x1x256xf32>
      tpu.vector_store %arg5[%c0_57, %c0_58, %c0_59], %211 {strides = array<i32>} : memref<1x1x256xf32, #tpu.memory_space<vmem>>, vector<1x1x256xf32>,
    } else {
    }
    return
  }
  func.func @transform_0(%arg0: i32, %arg1: i32) -> (i32, i32, i32) {
    %c0_i32 = arith.constant 0 : i32
    %c0_i32_0 = arith.constant 0 : i32
    return %arg0, %arg1, %c0_i32 : i32, i32, i32
  }
  func.func @transform_1(%arg0: i32, %arg1: i32) -> i32 {
    %c0_i32 = arith.constant 0 : i32
    %c0_i32_0 = arith.constant 0 : i32
    return %c0_i32 : i32
  }
  func.func @transform_2(%arg0: i32, %arg1: i32) -> i32 {
    %c0_i32 = arith.constant 0 : i32
    %c0_i32_0 = arith.constant 0 : i32
    return %c0_i32 : i32
  }
  func.func @transform_3(%arg0: i32, %arg1: i32) -> (i32, i32, i32) {
    %c0_i32 = arith.constant 0 : i32
    %c0_i32_0 = arith.constant 0 : i32
    %c0_i32_1 = arith.constant 0 : i32
    return %arg0, %c0_i32, %c0_i32_0 : i32, i32, i32
  }
}

</mosaic_0001>

<llo_original>
// kernel: tpu_custom_call.1
$region0: #{tpu_custom_call.1}
  #allocation0 [shape = 'u32[]', space=smem, size = 0x4, offset = 0x4, fixed_abs, tag = 'smem constant byte address 0x4 - core index']
  #allocation1 [shape = 'u32[144,128]{1,0:T(1,128)}', space=vmem, size = 0x12000, scoped, tag = 'internal scratch']
  #allocation2 [shape = 'f32[1,256]{1,0:T(1,128)}', space=vmem, size = 0x400, scoped, tag = 'scratch operand']
  #allocation3 [shape = 'f32[1,256]{1,0:T(1,128)}', space=vmem, size = 0x400, scoped, tag = 'scratch operand']
  #allocation4 [shape = 'f32[1]{0:T(128)S(6)}', space=smem, size = 0x200, scoped, tag = 'scoped memory for tpu_custom_call.1']
  %s0 = inlined_call_operand.hbm [shape: f32[2,4,256], index: 0, kind: input, shape index: {}]
  %s1 = inlined_call_operand.vmem [shape: f32[18], index: 1, kind: input, shape index: {}]
  %s2 = inlined_call_operand.<no memory space> [shape: f32[1], index: 2, kind: input, shape index: {}]
  %s3 = inlined_call_operand.hbm [shape: f32[2,1,256], index: 3, kind: output, shape index: {}]
  %s4 = sld [smem:[#allocation0]]
  $region61: #{tpu_custom_call.1} parent=0
    _
  %s6 = ssub.s32 1, %s4
  %s7 = scalar_select 0, %s6, %s4
  %8 = sst [smem:[#allocation4]] %s2
  $region1: #{tpu_custom_call.1} parent=0
    #allocation5 [shape = 'u8[8192]{0}', space=vmem, size = 0x2000, scoped, tag = 'input window, operand 0']
    #allocation6 [shape = 's32[2]{0}', space=sflag, size = 0x8, scoped, tag = 'scoped memory for tpu_custom_call.1']
    #allocation7 [shape = 's32[2]{0}', space=sflag, size = 0x8, scoped, tag = 'scoped memory for tpu_custom_call.1']
    #allocation8 [shape = 's32[2]{0}', space=sflag, size = 0x8, scoped, tag = 'scoped memory for tpu_custom_call.1']
    #allocation9 [shape = 'u8[512]{0}', space=smem, size = 0x200, scoped, tag = 'input window, operand 1, single buffered']
    #allocation10 [shape = 'u8[2048]{0}', space=vmem, size = 0x800, scoped, tag = 'output window, operand 0']
    %9 = vsyncpa [#allocation6], 0
    %s10 = scalar_lea.sflag [#allocation6], 1
    %11 = vsyncpa %s10, 0
    %12 = vsyncpa [#allocation8], 0
    %13 = vsyncpa [#allocation7], 0
    %s14 = scalar_lea.sflag [#allocation7], 1
    %15 = vsyncpa %s14, 0
    loop: start=0, step=1, limit=4
    $region2: #{tpu_custom_call.1} parent=1 // loop_pre_header
      _
    $region3: #{tpu_custom_call.1} parent=1 // loop_header
      %s17 = sphi 0, %s21
      %p18 = scmp.ge.s32.totalorder %s17, 4
      %s24 = sphi 0, %s36
      %s25 = sphi 0, %s32
      %s26 = sphi 0, %s24
      %s27 = sphi 0, %s25
      %s28 = sphi 0, %s26
      %s29 = sphi 0, %s27
      %s41 = sphi 0, %s43
      %s44 = sphi 0, %s41
      %s45 = sphi 0, %s44
      %s61 = sphi 0, %s45
      %s65 = sphi 0, %s65
      %s67 = sphi 0, %s65
      %s68 = sphi 0, %s67
      %s82 = sphi 0, %s68
      %s86 = sphi 0, %s86
      %s88 = sphi 0, %s86
      %s89 = sphi 0, %s88
      %s103 = sphi 0, %s89
      %s109 = sphi 0, %s111
      %s112 = sphi 0, %s109
      %s113 = sphi 0, %s112
      %s129 = sphi 0, %s113
    $region4: #{tpu_custom_call.1} parent=1 // loop_header_branch
      %20 = sbr.rel (%p18) target = $region8
    $region5: #{tpu_custom_call.1} parent=1 // loop_body
      %s22 = ssub.s32 %s17, 1
      %s23 = ssub.s32 %s17, 2
      %s30 = sadd.s32 1, %s25
      %p31 = scmp.ge.s32.totalorder %s30, 1
      %s32 = scalar_select %p31, 0, %s30
      %s33 = sadd.s32 1, %s24
      %s34 = scalar_select %p31, %s33, %s24
      %p35 = scmp.ge.s32.totalorder %s34, 2
      %s36 = scalar_select %p35, 0, %s34
      %s37 = ssub.s32 %s24, %s36
      %s38 = ssub.s32 %s25, %s32
      %s39 = sor.u32 %s37, %s38
      %p40 = scmp.eq.s32.totalorder %s39, 0
      %s42 = sadd.s32 %s41, 1
      %s43 = scalar_select %p40, %s41, %s42
      %p46 = pneg %p40
      %p47 = scmp.eq.s32.totalorder %s17, 1
      %p48 = por %p46, %p47
      %p49 = scmp.ne.s32.totalorder %s41, %s44
      %p50 = scmp.eq.s32.totalorder %s17, 0
      %p51 = por %p49, %p50
      %p52 = scmp.ne.s32.totalorder %s41, %s44
      %p53 = scmp.eq.s32.totalorder %s22, 1
      %p54 = por %p52, %p53
      %p55 = scmp.ne.s32.totalorder %s44, %s45
      %p56 = scmp.eq.s32.totalorder %s22, 0
      %p57 = por %p55, %p56
      %p58 = scmp.ne.s32.totalorder %s44, %s45
      %p59 = scmp.eq.s32.totalorder %s23, 1
      %p60 = por %p58, %p59
      %p62 = scmp.ne.s32.totalorder %s45, %s61
      %p63 = scmp.eq.s32.totalorder %s23, 0
      %p64 = por %p62, %p63
      %s66 = sadd.s32 %s65, 1
      %p69 = scmp.eq.s32.totalorder %s17, 1
      %p70 = scmp.ne.s32.totalorder %s65, %s67
      %p71 = scmp.eq.s32.totalorder %s17, 0
      %p72 = por %p70, %p71
      %p73 = scmp.ne.s32.totalorder %s65, %s67
      %p74 = scmp.eq.s32.totalorder %s22, 1
      %p75 = por %p73, %p74
      %p76 = scmp.ne.s32.totalorder %s67, %s68
      %p77 = scmp.eq.s32.totalorder %s22, 0
      %p78 = por %p76, %p77
      %p79 = scmp.ne.s32.totalorder %s67, %s68
      %p80 = scmp.eq.s32.totalorder %s23, 1
      %p81 = por %p79, %p80
      %p83 = scmp.ne.s32.totalorder %s68, %s82
      %p84 = scmp.eq.s32.totalorder %s23, 0
      %p85 = por %p83, %p84
      %s87 = sadd.s32 %s86, 1
      %p90 = scmp.eq.s32.totalorder %s17, 1
      %p91 = scmp.ne.s32.totalorder %s86, %s88
      %p92 = scmp.eq.s32.totalorder %s17, 0
      %p93 = por %p91, %p92
      %p94 = scmp.ne.s32.totalorder %s86, %s88
      %p95 = scmp.eq.s32.totalorder %s22, 1
      %p96 = por %p94, %p95
      %p97 = scmp.ne.s32.totalorder %s88, %s89
      %p98 = scmp.eq.s32.totalorder %s22, 0
      %p99 = por %p97, %p98
      %p100 = scmp.ne.s32.totalorder %s88, %s89
      %p101 = scmp.eq.s32.totalorder %s23, 1
      %p102 = por %p100, %p101
      %p104 = scmp.ne.s32.totalorder %s89, %s103
      %p105 = scmp.eq.s32.totalorder %s23, 0
      %p106 = por %p104, %p105
      %s107 = ssub.s32 %s24, %s36
      %p108 = scmp.eq.s32.totalorder %s107, 0
      %s110 = sadd.s32 %s109, 1
      %s111 = scalar_select %p108, %s109, %s110
      %p114 = pneg %p108
      %p115 = scmp.eq.s32.totalorder %s17, 1
      %p116 = por %p114, %p115
      %p117 = scmp.ne.s32.totalorder %s109, %s112
      %p118 = scmp.eq.s32.totalorder %s17, 0
      %p119 = por %p117, %p118
      %p120 = scmp.ne.s32.totalorder %s109, %s112
      %p121 = scmp.eq.s32.totalorder %s22, 1
      %p122 = por %p120, %p121
      %p123 = scmp.ne.s32.totalorder %s112, %s113
      %p124 = scmp.eq.s32.totalorder %s22, 0
      %p125 = por %p123, %p124
      %p126 = scmp.ne.s32.totalorder %s112, %s113
      %p127 = scmp.eq.s32.totalorder %s23, 1
      %p128 = por %p126, %p127
      %p130 = scmp.ne.s32.totalorder %s113, %s129
      %p131 = scmp.eq.s32.totalorder %s23, 0
      %p132 = por %p130, %p131
      %p133 = scmp.le.s32.totalorder 1, %s17
      %p134 = scmp.lt.s32.totalorder %s17, 3
      %p135 = pnand %p133, %p134
      %p136 = pneg %p135
      // Predicated region
      $region9: #{tpu_custom_call.1} parent=5 // pred_check
        _
      $region10: #{tpu_custom_call.1} parent=5 // pred_check_branch
        %138 = sbr.rel (%p135) target = $region12
      $region11: #{tpu_custom_call.1} parent=5 // pred_region
        %s139 = ssub.s32 %s17, 1
        // Predicated region
        $region13: #{tpu_custom_call.1} parent=11 // pred_check
          %p140 = pneg %p78
        $region14: #{tpu_custom_call.1} parent=11 // pred_check_branch
          %142 = sbr.rel (%p140) target = $region16
        $region15: #{tpu_custom_call.1} parent=11 // pred_region
          %s144 = ssub.s32 16, 16
          %145 = vsyncadd [#allocation8], %s144
          %s147 = sshll.u32 %s1, 4
          %s148 = int_to_ptr.vmem [resolvable:$true] %s147
          %150 = dma.vmem_to_smem %s148, 16, [#allocation9], [#allocation8]
        $region16: #{tpu_custom_call.1} parent=11 // pred_fallthru
          _
        // Predicated region
        $region17: #{tpu_custom_call.1} parent=11 // pred_check
          %p151 = pneg %p99
        $region18: #{tpu_custom_call.1} parent=11 // pred_check_branch
          %153 = sbr.rel (%p151) target = $region20
        $region19: #{tpu_custom_call.1} parent=11 // pred_region
          _
        $region20: #{tpu_custom_call.1} parent=11 // pred_fallthru
          _
      $region12: #{tpu_custom_call.1} parent=5 // pred_fallthru
        _
      %p154 = scmp.lt.s32.totalorder %s17, 2
      // Predicated region
      $region21: #{tpu_custom_call.1} parent=5 // pred_check
        %p155 = pneg %p154
      $region22: #{tpu_custom_call.1} parent=5 // pred_check_branch
        %157 = sbr.rel (%p155) target = $region24
      $region23: #{tpu_custom_call.1} parent=5 // pred_region
        // Predicated region
        $region25: #{tpu_custom_call.1} parent=23 // pred_check
          %p158 = pneg %p51
        $region26: #{tpu_custom_call.1} parent=23 // pred_check_branch
          %160 = sbr.rel (%p158) target = $region28
        $region27: #{tpu_custom_call.1} parent=23 // pred_region
          %s161 = sand.u32 %s41, 1
          %s162 = scalar_lea.sflag [#allocation6], %s161
          %s163 = sand.u32 %s41, 1
          %s164 = smul.addr %s163, 8
          %s165 = scalar_lea.vmem [#allocation5], %s164
          %s167 = ssub.s32 128, 128
          %168 = vsyncadd %s162, %s167
          %s169 = smul.addr %s25, 2
          %s170 = smul.addr %s24, 2
          %s171 = sadd.s32 %s169, %s170
          %s172 = smul.addr %s171, 64
          %s173 = scalar_lea.hbm %s0, %s172
          %s175 = sshll.u32 %s165, 4
          %s176 = int_to_ptr.vmem [resolvable:$true] %s175
          %178 = dma.hbm_to_vmem [thread:$0]  %s173, 128, %s176, %s162
        $region28: #{tpu_custom_call.1} parent=23 // pred_fallthru
          _
      $region24: #{tpu_custom_call.1} parent=5 // pred_fallthru
        _
      %p179 = scmp.le.s32.totalorder 1, %s17
      %p180 = scmp.lt.s32.totalorder %s17, 3
      %p181 = pnand %p179, %p180
      %p182 = pneg %p181
      // Predicated region
      $region29: #{tpu_custom_call.1} parent=5 // pred_check
        _
      $region30: #{tpu_custom_call.1} parent=5 // pred_check_branch
        %184 = sbr.rel (%p181) target = $region32
      $region31: #{tpu_custom_call.1} parent=5 // pred_region
        %s185 = ssub.s32 %s17, 1
        %s186 = sand.u32 %s44, 1
        %s187 = scalar_lea.sflag [#allocation6], %s186
        %s188 = sand.u32 %s44, 1
        %s189 = smul.addr %s188, 8
        %s190 = scalar_lea.vmem [#allocation5], %s189
        // Predicated region
        $region33: #{tpu_custom_call.1} parent=31 // pred_check
          %p191 = pneg %p57
        $region34: #{tpu_custom_call.1} parent=31 // pred_check_branch
          %193 = sbr.rel (%p191) target = $region36
        $region35: #{tpu_custom_call.1} parent=31 // pred_region
          %194 = dma.done %s187, 128
        $region36: #{tpu_custom_call.1} parent=31 // pred_fallthru
          _
        // Predicated region
        $region37: #{tpu_custom_call.1} parent=31 // pred_check
          %p195 = pneg %p78
        $region38: #{tpu_custom_call.1} parent=31 // pred_check_branch
          %197 = sbr.rel (%p195) target = $region40
        $region39: #{tpu_custom_call.1} parent=31 // pred_region
          %198 = dma.done [#allocation8], 16
        $region40: #{tpu_custom_call.1} parent=31 // pred_fallthru
          _
        %199 = sfence
        %s200 = sand.u32 %s44, 1
        %s201 = scalar_lea.sflag [#allocation6], %s200
        %s202 = sand.u32 %s44, 1
        %s203 = smul.addr %s202, 8
        %s204 = scalar_lea.vmem [#allocation5], %s203
        %p205 = pneg %p57
        %p206 = pneg %p54
        %p207 = pneg %p78
        %p208 = pneg %p75
        %p209 = pneg %p99
        %p210 = pneg %p96
        %p211 = pneg %p125
        %p212 = pneg %p122
        %s213 = sand.u32 %s112, 1
        %s214 = scalar_lea.sflag [#allocation7], %s213
        %s215 = sand.u32 %s112, 1
        %s216 = smul.addr %s215, 2
        %s217 = scalar_lea.vmem [#allocation10], %s216
        %v218 = vld [vmem:[%s190] sm:$0xff]
        %v220 = vcombine.high %v218, %v218
        %vm222 = vcmask 1043456
        %v223 = vsel %vm222, %v218, -inf
        %v224 = vrot.slane %v223, 4
        %v225 = vmax.f32 %v223, %v224
        %v226 = vrot.slane %v225, 2
        %v227 = vmax.f32 %v225, %v226
        %v228 = vrot.slane %v227, 1
        %v229 = vmax.f32 %v227, %v228
        %v230 = vsel %vm222, %v220, -inf
        %v231 = vrot.slane %v230, 4
        %v232 = vmax.f32 %v230, %v231
        %v233 = vrot.slane %v232, 2
        %v234 = vmax.f32 %v232, %v233
        %v235 = vrot.slane %v234, 1
        %v236 = vmax.f32 %v234, %v235
        %v237 = vsel %vm222, %v218, 0.0
        %v238 = vrot.slane %v237, 4
        %v239 = vadd.f32 %v237, %v238
        %v240 = vrot.slane %v239, 2
        %v241 = vadd.f32 %v239, %v240
        %v242 = vrot.slane %v241, 1
        %v243 = vadd.f32 %v241, %v242
        %v244 = vsel %vm222, %v220, 0.0
        %v245 = vrot.slane %v244, 4
        %v246 = vadd.f32 %v244, %v245
        %v247 = vrot.slane %v246, 2
        %v248 = vadd.f32 %v246, %v247
        %v249 = vrot.slane %v248, 1
        %v250 = vadd.f32 %v248, %v249
        %p251 = scmp.eq.s32.totalorder %s27, 0
        // Predicated region
        $region41: #{tpu_custom_call.1} parent=31 // pred_check
          %p252 = pneg %p251
        $region42: #{tpu_custom_call.1} parent=31 // pred_check_branch
          %254 = sbr.rel (%p252) target = $region44
        $region43: #{tpu_custom_call.1} parent=31 // pred_region
          %v255 = vlaneseq
          %vm256 = vcmp.ge.s32.totalorder %v255, 0
          %vm257 = vcmp.lt.s32.totalorder %v255, 256
          %vm258 = vmand %vm256, %vm257
          %259 = vst.msk [vmem:[#allocation2] sm:$0x3] %vm258, -inf
          %260 = vst.msk [vmem:[#allocation3] sm:$0x3] %vm258, 0.0
        $region44: #{tpu_custom_call.1} parent=31 // pred_fallthru
          _
        %v261 = vld [vmem:[#allocation2] sm:$0x3]
        %v264 = vcombine.low %v229, %v236
        %v266 = vunpack.c.l.s4 1966171168
        %v267 = vunpack.c.0.s8 %v266
        %v268 = vlaneseq
        %v269 = vshrl.u32 %v268, 7
        %v270 = vsub.s32 %v267, %v269
        %v271 = vrot.slane %v264, %v270
        %v273 = vunpack.c.l.s4 1966171168
        %v274 = vunpack.c.0.s8 %v273
        %v275 = vlaneseq
        %v276 = vshrl.u32 %v275, 7
        %v277 = vsub.s32 %v274, %v276
        %v278 = vrot.slane %v271, %v277
        %v280 = vmax.f32 %v261, %v278
        %v281 = vlaneseq
        %vm282 = vcmp.ge.s32.totalorder %v281, 0
        %vm283 = vcmp.lt.s32.totalorder %v281, 256
        %vm284 = vmand %vm282, %vm283
        %285 = vst.msk [vmem:[#allocation2] sm:$0x3] %vm284, %v280
        %v286 = vld [vmem:[#allocation3] sm:$0x3]
        %v289 = vcombine.low %v243, %v250
        %v291 = vunpack.c.l.s4 1966171168
        %v292 = vunpack.c.0.s8 %v291
        %v293 = vlaneseq
        %v294 = vshrl.u32 %v293, 7
        %v295 = vsub.s32 %v292, %v294
        %v296 = vrot.slane %v289, %v295
        %v298 = vunpack.c.l.s4 1966171168
        %v299 = vunpack.c.0.s8 %v298
        %v300 = vlaneseq
        %v301 = vshrl.u32 %v300, 7
        %v302 = vsub.s32 %v299, %v301
        %v303 = vrot.slane %v296, %v302
        %v305 = vadd.f32 %v286, %v303
        %306 = vst.msk [vmem:[#allocation3] sm:$0x3] %vm284, %v305
        // Predicated region
        $region45: #{tpu_custom_call.1} parent=31 // pred_check
          %p307 = pneg %p251
        $region46: #{tpu_custom_call.1} parent=31 // pred_check_branch
          %309 = sbr.rel (%p307) target = $region48
        $region47: #{tpu_custom_call.1} parent=31 // pred_region
          %v310 = vld [vmem:[#allocation2] sm:$0x3]
          %v311 = vld [vmem:[#allocation3] sm:$0x3]
          %v312 = vmul.f32 %v311, 0.25
          %v314 = vlaneseq
          %v315 = vshrl.u32 %v314, 7
          %v316 = vsub.s32 0, %v315
          %v317 = vrot.slane %v310, %v316
          %v318 = vlaneseq
          %v319 = vshrl.u32 %v318, 7
          %v320 = vsub.s32 1, %v319
          %v321 = vrot.slane %v310, %v320
          %322 = vrot.lane.b32.xlu0 %v317, 17
          %v323 = vpop.permute.xlu0 %322
          %324 = vrot.lane.b32.xlu0 %v321, 17
          %v325 = vpop.permute.xlu0 %324
          %vm326 = vcmask 138240
          %v327 = vsel %vm326, %v323, %v325
          %v331 = vsel %vm326, 0.0, %v323
          %v332 = vsel %vm326, %v325, 0.0
          %v334 = vlaneseq
          %v335 = vshrl.u32 %v334, 7
          %v336 = vsub.s32 0, %v335
          %v337 = vrot.slane %v312, %v336
          %v338 = vlaneseq
          %v339 = vshrl.u32 %v338, 7
          %v340 = vsub.s32 1, %v339
          %v341 = vrot.slane %v312, %v340
          %342 = vrot.lane.b32.xlu0 %v337, 17
          %v343 = vpop.permute.xlu0 %342
          %344 = vrot.lane.b32.xlu0 %v341, 17
          %v345 = vpop.permute.xlu0 %344
          %v346 = vsel %vm326, %v343, %v345
          %v350 = vsel %vm326, 0.0, %v343
          %v351 = vsel %vm326, %v345, 0.0
          %v352 = vlaneseq
          %v353 = vand.u32 %v352, 127
          %v354 = vadd.s32 %v353, 128
          %vm355 = vcmp.lt.s32.totalorder %v353, 0
          %v356 = vsub.s32 0, %v353
          %v357 = vsel %vm355, %v356, %v353
          %v358 = vshrl.u32 %v357, 4
          %v359 = vand.u32 %v357, 15
          %v360 = vsub.s32 0, %v359
          %v361 = vsel %vm355, %v360, %v359
          %vm362 = vcmp.lt.s32.totalorder %v354, 0
          %v363 = vsub.s32 0, %v354
          %v364 = vsel %vm362, %v363, %v354
          %v365 = vshrl.u32 %v364, 4
          %v366 = vand.u32 %v364, 15
          %v367 = vsub.s32 0, %v366
          %v368 = vsel %vm362, %v367, %v366
          %vm369 = vcmp.ne.s32.totalorder %v361, 0
          %vm370 = vcmp.ne.s32.totalorder %v368, 0
          %vm371 = vcmp.lt.s32.totalorder %v361, 0
          %vm372 = vcmp.lt.s32.totalorder %v368, 0
          %vm373 = vmand %vm371, %vm369
          %vm374 = vmand %vm372, %vm370
          %v375 = vadd.s32 %v361, 16
          %v376 = vadd.s32 %v368, 16
          %v377 = vsel %vm373, %v375, %v361
          %v378 = vsel %vm374, %v376, %v368
          %s379 = sld [smem:[#allocation9]]
          %s380 = sld [smem:[#allocation9 + $0x1]]
          %s381 = sld [smem:[#allocation9 + $0x2]]
          %s382 = sld [smem:[#allocation9 + $0x3]]
          %s383 = sld [smem:[#allocation9 + $0x4]]
          %s384 = sld [smem:[#allocation9 + $0x5]]
          %s385 = sld [smem:[#allocation9 + $0x6]]
          %s386 = sld [smem:[#allocation9 + $0x7]]
          %s387 = sld [smem:[#allocation9 + $0x8]]
          %s388 = sld [smem:[#allocation9 + $0x9]]
          %s389 = sld [smem:[#allocation9 + $0xa]]
          %s390 = sld [smem:[#allocation9 + $0xb]]
          %s391 = sld [smem:[#allocation9 + $0xc]]
          %s392 = sld [smem:[#allocation9 + $0xd]]
          %s393 = sld [smem:[#allocation9 + $0xe]]
          %s394 = sld [smem:[#allocation9 + $0xf]]
          %s395 = sld [smem:[#allocation9 + $0x10]]
          %s396 = sld [smem:[#allocation9 + $0x11]]
          %s397 = sld [smem:[#allocation4]]
          %v398 = vstv %s397
          %v399 = vstv %s379
          %v400 = vmul.f32 %v399, %v331
          %v401 = vmul.f32 %v399, %v327
          %v402 = vstv %s388
          %v403 = vmul.f32 %v402, %v350
          %v404 = vmul.f32 %v402, %v346
          %v405 = vadd.f32 %v400, %v403
          %v406 = vadd.f32 %v401, %v404
          %v407 = vadd.s32 %v377, 4294967295
          %v408 = vadd.s32 %v378, 4294967295
          %vm409 = vcmp.ge.s32.totalorder %v407, 0
          %vm410 = vcmp.ge.s32.totalorder %v408, 0
          %vm411 = vcmp.lt.s32.totalorder %v407, 16
          %vm412 = vcmp.lt.s32.totalorder %v408, 16
          %vm413 = vmand %vm409, %vm411
          %vm414 = vmand %vm410, %vm412
          %v415 = vsel %vm413, %v405, 0.0
          %v416 = vsel %vm414, %v406, 0.0
          %v417 = vadd.f32 %v398, %v415
          %v418 = vadd.f32 %v398, %v416
          %v419 = vstv %s380
          %v420 = vmul.f32 %v419, %v331
          %v421 = vmul.f32 %v419, %v327
          %v422 = vmul.f32 %v419, %v332
          %v423 = vstv %s389
          %v424 = vmul.f32 %v423, %v350
          %v425 = vmul.f32 %v423, %v346
          %v426 = vmul.f32 %v423, %v351
          %v427 = vadd.f32 %v420, %v424
          %v428 = vadd.f32 %v421, %v425
          %v429 = vadd.f32 %v422, %v426
          %433 = vrot.lane.b32.xlu0 %v427, 127
          %v434 = vpop.permute.xlu0 %433
          %435 = vrot.lane.b32.xlu0 %v428, 127
          %v436 = vpop.permute.xlu0 %435
          %437 = vrot.lane.b32.xlu0 %v429, 127
          %v438 = vpop.permute.xlu0 %437
          %vm439 = vcmask 1039360
          %v440 = vsel %vm439, %v434, %v436
          %v441 = vsel %vm439, %v436, %v438
          %v444 = vadd.f32 %v417, %v440
          %v445 = vadd.f32 %v418, %v441
          %v446 = vstv %s381
          %v447 = vmul.f32 %v446, %v331
          %v448 = vmul.f32 %v446, %v327
          %v449 = vmul.f32 %v446, %v332
          %v450 = vstv %s390
          %v451 = vmul.f32 %v450, %v350
          %v452 = vmul.f32 %v450, %v346
          %v453 = vmul.f32 %v450, %v351
          %v454 = vadd.f32 %v447, %v451
          %v455 = vadd.f32 %v448, %v452
          %v456 = vadd.f32 %v449, %v453
          %v457 = vadd.s32 %v377, 1
          %v458 = vadd.s32 %v378, 1
          %vm459 = vcmp.ge.s32.totalorder %v457, 0
          %vm460 = vcmp.ge.s32.totalorder %v458, 0
          %vm461 = vcmp.lt.s32.totalorder %v457, 16
          %vm462 = vcmp.lt.s32.totalorder %v458, 16
          %vm463 = vmand %vm459, %vm461
          %vm464 = vmand %vm460, %vm462
          %468 = vrot.lane.b32.xlu0 %v454, 126
          %v469 = vpop.permute.xlu0 %468
          %470 = vrot.lane.b32.xlu0 %v455, 126
          %v471 = vpop.permute.xlu0 %470
          %472 = vrot.lane.b32.xlu0 %v456, 126
          %v473 = vpop.permute.xlu0 %472
          %vm474 = vcmask 1031168
          %v475 = vsel %vm474, %v469, %v471
          %v476 = vsel %vm474, %v471, %v473
          %v479 = vsel %vm463, %v475, 0.0
          %v480 = vsel %vm464, %v476, 0.0
          %v481 = vadd.f32 %v444, %v479
          %v482 = vadd.f32 %v445, %v480
          %v483 = vstv %s382
          %v484 = vmul.f32 %v483, %v331
          %v485 = vmul.f32 %v483, %v327
          %v486 = vmul.f32 %v483, %v332
          %v487 = vstv %s391
          %v488 = vmul.f32 %v487, %v350
          %v489 = vmul.f32 %v487, %v346
          %v490 = vmul.f32 %v487, %v351
          %v491 = vadd.f32 %v484, %v488
          %v492 = vadd.f32 %v485, %v489
          %v493 = vadd.f32 %v486, %v490
          %497 = vrot.lane.b32.xlu0 %v491, 112
          %v498 = vpop.permute.xlu0 %497
          %499 = vrot.lane.b32.xlu0 %v492, 112
          %v500 = vpop.permute.xlu0 %499
          %501 = vrot.lane.b32.xlu0 %v493, 112
          %v502 = vpop.permute.xlu0 %501
          %vm503 = vcmask 916480
          %v504 = vsel %vm503, %v498, %v500
          %v505 = vsel %vm503, %v500, %v502
          %v508 = vsel %vm413, %v504, 0.0
          %v509 = vsel %vm414, %v505, 0.0
          %v510 = vadd.f32 %v481, %v508
          %v511 = vadd.f32 %v482, %v509
          %v512 = vstv %s383
          %v513 = vmul.f32 %v512, %v331
          %v514 = vmul.f32 %v512, %v327
          %v515 = vmul.f32 %v512, %v332
          %v516 = vstv %s392
          %v517 = vmul.f32 %v516, %v350
          %v518 = vmul.f32 %v516, %v346
          %v519 = vmul.f32 %v516, %v351
          %v520 = vadd.f32 %v513, %v517
          %v521 = vadd.f32 %v514, %v518
          %v522 = vadd.f32 %v515, %v519
          %526 = vrot.lane.b32.xlu0 %v520, 111
          %v527 = vpop.permute.xlu0 %526
          %528 = vrot.lane.b32.xlu0 %v521, 111
          %v529 = vpop.permute.xlu0 %528
          %530 = vrot.lane.b32.xlu0 %v522, 111
          %v531 = vpop.permute.xlu0 %530
          %vm532 = vcmask 908288
          %v533 = vsel %vm532, %v527, %v529
          %v534 = vsel %vm532, %v529, %v531
          %v537 = vadd.f32 %v510, %v533
          %v538 = vadd.f32 %v511, %v534
          %v539 = vstv %s384
          %v540 = vmul.f32 %v539, %v331
          %v541 = vmul.f32 %v539, %v327
          %v542 = vmul.f32 %v539, %v332
          %v543 = vstv %s393
          %v544 = vmul.f32 %v543, %v350
          %v545 = vmul.f32 %v543, %v346
          %v546 = vmul.f32 %v543, %v351
          %v547 = vadd.f32 %v540, %v544
          %v548 = vadd.f32 %v541, %v545
          %v549 = vadd.f32 %v542, %v546
          %553 = vrot.lane.b32.xlu0 %v547, 110
          %v554 = vpop.permute.xlu0 %553
          %555 = vrot.lane.b32.xlu0 %v548, 110
          %v556 = vpop.permute.xlu0 %555
          %557 = vrot.lane.b32.xlu0 %v549, 110
          %v558 = vpop.permute.xlu0 %557
          %vm559 = vcmask 900096
          %v560 = vsel %vm559, %v554, %v556
          %v561 = vsel %vm559, %v556, %v558
          %v564 = vsel %vm463, %v560, 0.0
          %v565 = vsel %vm464, %v561, 0.0
          %v566 = vadd.f32 %v537, %v564
          %v567 = vadd.f32 %v538, %v565
          %v568 = vstv %s385
          %v569 = vmul.f32 %v568, %v331
          %v570 = vmul.f32 %v568, %v327
          %v571 = vmul.f32 %v568, %v332
          %v572 = vstv %s394
          %v573 = vmul.f32 %v572, %v350
          %v574 = vmul.f32 %v572, %v346
          %v575 = vmul.f32 %v572, %v351
          %v576 = vadd.f32 %v569, %v573
          %v577 = vadd.f32 %v570, %v574
          %v578 = vadd.f32 %v571, %v575
          %582 = vrot.lane.b32.xlu0 %v576, 96
          %v583 = vpop.permute.xlu0 %582
          %584 = vrot.lane.b32.xlu0 %v577, 96
          %v585 = vpop.permute.xlu0 %584
          %586 = vrot.lane.b32.xlu0 %v578, 96
          %v587 = vpop.permute.xlu0 %586
          %vm588 = vcmask 785408
          %v589 = vsel %vm588, %v583, %v585
          %v590 = vsel %vm588, %v585, %v587
          %v593 = vsel %vm413, %v589, 0.0
          %v594 = vsel %vm414, %v590, 0.0
          %v595 = vadd.f32 %v566, %v593
          %v596 = vadd.f32 %v567, %v594
          %v597 = vstv %s386
          %v598 = vmul.f32 %v597, %v331
          %v599 = vmul.f32 %v597, %v327
          %v600 = vmul.f32 %v597, %v332
          %v601 = vstv %s395
          %v602 = vmul.f32 %v601, %v350
          %v603 = vmul.f32 %v601, %v346
          %v604 = vmul.f32 %v601, %v351
          %v605 = vadd.f32 %v598, %v602
          %v606 = vadd.f32 %v599, %v603
          %v607 = vadd.f32 %v600, %v604
          %611 = vrot.lane.b32.xlu0 %v605, 95
          %v612 = vpop.permute.xlu0 %611
          %613 = vrot.lane.b32.xlu0 %v606, 95
          %v614 = vpop.permute.xlu0 %613
          %615 = vrot.lane.b32.xlu0 %v607, 95
          %v616 = vpop.permute.xlu0 %615
          %vm617 = vcmask 777216
          %v618 = vsel %vm617, %v612, %v614
          %v619 = vsel %vm617, %v614, %v616
          %v622 = vadd.f32 %v595, %v618
          %v623 = vadd.f32 %v596, %v619
          %v624 = vstv %s387
          %v625 = vmul.f32 %v624, %v331
          %v626 = vmul.f32 %v624, %v327
          %v627 = vmul.f32 %v624, %v332
          %v628 = vstv %s396
          %v629 = vmul.f32 %v628, %v350
          %v630 = vmul.f32 %v628, %v346
          %v631 = vmul.f32 %v628, %v351
          %v632 = vadd.f32 %v625, %v629
          %v633 = vadd.f32 %v626, %v630
          %v634 = vadd.f32 %v627, %v631
          %638 = vrot.lane.b32.xlu0 %v632, 94
          %v639 = vpop.permute.xlu0 %638
          %640 = vrot.lane.b32.xlu0 %v633, 94
          %v641 = vpop.permute.xlu0 %640
          %642 = vrot.lane.b32.xlu0 %v634, 94
          %v643 = vpop.permute.xlu0 %642
          %vm644 = vcmask 769024
          %v645 = vsel %vm644, %v639, %v641
          %v646 = vsel %vm644, %v641, %v643
          %v649 = vsel %vm463, %v645, 0.0
          %v650 = vsel %vm464, %v646, 0.0
          %v651 = vadd.f32 %v622, %v649
          %v652 = vadd.f32 %v623, %v650
          %v653 = vxor.u32 %v651, 2147483648
          %v654 = vxor.u32 %v652, 2147483648
          %v655 = vmul.f32 %v653, 1.442695
          %v656 = vpow.pop %v655
          %v657 = vmul.f32 %v654, 1.442695
          %v658 = vpow.pop %v657
          %v659 = vadd.f32 %v656, 1.0
          %v660 = vadd.f32 %v658, 1.0
          %v661 = vrcp.pop %v659
          %v662 = vmul.f32 1.0, %v661
          %v663 = vrcp.pop %v660
          %v664 = vmul.f32 1.0, %v663
          %v667 = vcombine.low %v662, %v664
          %v669 = vunpack.c.l.s4 1966171168
          %v670 = vunpack.c.0.s8 %v669
          %v671 = vlaneseq
          %v672 = vshrl.u32 %v671, 7
          %v673 = vsub.s32 %v670, %v672
          %v674 = vrot.slane %v667, %v673
          %v676 = vunpack.c.l.s4 1966171168
          %v677 = vunpack.c.0.s8 %v676
          %v678 = vlaneseq
          %v679 = vshrl.u32 %v678, 7
          %v680 = vsub.s32 %v677, %v679
          %v681 = vrot.slane %v674, %v680
          %683 = vst.msk [vmem:[%s217] sm:$0x3] %vm284, %v681
        $region48: #{tpu_custom_call.1} parent=31 // pred_fallthru
          _
        %s684 = sand.u32 %s112, 1
        %s685 = scalar_lea.sflag [#allocation7], %s684
        %s686 = sand.u32 %s112, 1
        %s687 = smul.addr %s686, 2
        %s688 = scalar_lea.vmem [#allocation10], %s687
        // Predicated region
        $region49: #{tpu_custom_call.1} parent=31 // pred_check
          %p689 = pneg %p122
        $region50: #{tpu_custom_call.1} parent=31 // pred_check_branch
          %691 = sbr.rel (%p689) target = $region52
        $region51: #{tpu_custom_call.1} parent=31 // pred_region
          %s693 = ssub.s32 32, 32
          %694 = vsyncadd %s685, %s693
          %s695 = smul.addr %s26, 2
          %s696 = smul.addr %s695, 16
          %s697 = scalar_lea.hbm %s3, %s696
          %s699 = sshll.u32 %s688, 4
          %s700 = int_to_ptr.vmem [resolvable:$true] %s699
          %702 = dma.vmem_to_hbm [thread:$0]  %s700, 32, %s697, %s685
        $region52: #{tpu_custom_call.1} parent=31 // pred_fallthru
          _
      $region32: #{tpu_custom_call.1} parent=5 // pred_fallthru
        _
      %p703 = scmp.le.s32.totalorder 2, %s17
      // Predicated region
      $region53: #{tpu_custom_call.1} parent=5 // pred_check
        %p704 = pneg %p703
      $region54: #{tpu_custom_call.1} parent=5 // pred_check_branch
        %706 = sbr.rel (%p704) target = $region56
      $region55: #{tpu_custom_call.1} parent=5 // pred_region
        %s707 = ssub.s32 %s17, 2
        // Predicated region
        $region57: #{tpu_custom_call.1} parent=55 // pred_check
          %p708 = pneg %p128
        $region58: #{tpu_custom_call.1} parent=55 // pred_check_branch
          %710 = sbr.rel (%p708) target = $region60
        $region59: #{tpu_custom_call.1} parent=55 // pred_region
          %s711 = sand.u32 %s113, 1
          %s712 = scalar_lea.sflag [#allocation7], %s711
          %s713 = sand.u32 %s113, 1
          %s714 = smul.addr %s713, 2
          %s715 = scalar_lea.vmem [#allocation10], %s714
          %716 = dma.done %s712, 32
        $region60: #{tpu_custom_call.1} parent=55 // pred_fallthru
          _
      $region56: #{tpu_custom_call.1} parent=5 // pred_fallthru
        _
    $region6: #{tpu_custom_call.1} parent=1 // loop_footer
      %s21 = sadd.s32 1, %s17
    $region7: #{tpu_custom_call.1} parent=1 // loop_footer_branch
      %16 = sbr.rel target = $region3
    $region8: #{tpu_custom_call.1} parent=1 // loop_exit
      _
    %717 = vsyncpa [#allocation6], 1
    %s718 = scalar_lea.sflag [#allocation6], 1
    %719 = vsyncpa %s718, 1
    %720 = vsyncpa [#allocation7], 1
    %s721 = scalar_lea.sflag [#allocation7], 1
    %722 = vsyncpa %s721, 1
    %723 = vsyncpa [#allocation8], 1
    %s724 = scalar_lea.sflag [#allocation8], 1
    %725 = vsyncpa %s724, 1

</llo_original>
